<compile_context>
chip_gen: v5e
topology: v5e:2x2
jax: 0.10.0
libtpu: 0.0.40
codegen_flags: <defaults>
</compile_context>

<pallas_src>
import math

import jax
import jax.numpy as jnp
from jax.experimental import pallas as pl
from jax.experimental.pallas import tpu as pltpu

EPS = 1e-9


# ----------------------------- Pallas kernel ----------------------------------

def _global_attn_kernel(x_ref, wq_ref, bq_ref, wk_ref, bk_ref, ones_ref,
                        wv_ref, bv_ref, o_ref):
    # Block views (batch grid dim squeezed away by the BlockSpecs):
    #   x_ref  : (N, dim)        wq_ref : (dim, 256)     bq_ref : (1, 256)
    #   wk_ref : (256, H*K)      bk_ref : (1, H*K)       ones_ref: (H*K, H*K)
    #   wv_ref : (H*K, dim)      bv_ref : (1, dim)       o_ref  : (N, dim)
    x = x_ref[...]

    # q projection, all heads at once (MXU, f32 accumulation).
    q = jnp.dot(x, wq_ref[...], preferred_element_type=jnp.float32) + bq_ref[...]

    # per-head attention logits against the shared K memory slots, folded into
    # one lane-dense matmul via the block-diagonal mk weight.
    attn = jnp.dot(q, wk_ref[...], preferred_element_type=jnp.float32) + bk_ref[...]

    # softmax over the *token* axis (dim=-2 in the PyTorch module); columns are
    # independent, so folding heads into lanes does not change the result.
    attn = jnp.exp(attn - jnp.max(attn, axis=0, keepdims=True))
    attn = attn * pl.reciprocal(jnp.sum(attn, axis=0, keepdims=True), approx=True)

    # double normalization over each head's K memory slots: block-diagonal ones
    # matmul = per-head row sum, broadcast back to all lanes of that head.
    head_sum = jnp.dot(attn, ones_ref[...], preferred_element_type=jnp.float32)
    attn = attn * pl.reciprocal(EPS + head_sum, approx=True)

    # mv, all heads at once (block-diagonal weight); output columns are already
    # in [head0 dv | head1 dv | ...] order == the PyTorch permute+reshape.
    out = jnp.dot(attn, wv_ref[...], preferred_element_type=jnp.float32) + bv_ref[...]
    o_ref[...] = out.astype(o_ref.dtype)


# ----------------------------- wrapper -----------------------------------------

def global_attention(x, params, num_heads):
    """x: (B, N, dim) -> (B, N, dim), matching GlobalAttention.forward."""
    B, N, dim = x.shape
    wq, bq = params["wq"], params["bq"]          # (dim, 256), (256,)
    wk, bk = params["wk"], params["bk"]          # (dq, K),    (K,)
    wv, bv = params["wv"], params["bv"]          # (K, dv),    (dv,)
    d_model = wq.shape[1]
    dq = d_model // num_heads
    K = wk.shape[1]
    dv = wv.shape[1]
    HK = num_heads * K
    assert dim == num_heads * dv and d_model == num_heads * dq

    # Wrapper-side, one-time construction of the head-folded weights.
    f32 = jnp.float32
    eye = jnp.eye(num_heads, dtype=f32)
    wk_bd = jnp.kron(eye, wk.astype(f32))                      # (H*dq, H*K) = (256, 256)
    bk_bd = jnp.tile(bk.astype(f32), num_heads).reshape(1, HK)  # (1, H*K)
    wv_bd = jnp.kron(eye, wv.astype(f32))                      # (H*K, dim)
    bv_bd = jnp.tile(bv.astype(f32), num_heads).reshape(1, dim)
    ones_bd = jnp.kron(eye, jnp.ones((K, K), f32))             # (H*K, H*K)
    bq2 = bq.reshape(1, d_model)

    return pl.pallas_call(
        _global_attn_kernel,
        out_shape=jax.ShapeDtypeStruct((B, N, dim), x.dtype),
        grid=(B,),
        in_specs=[
            pl.BlockSpec((None, N, dim), lambda b: (b, 0, 0)),   # x batch slice
            pl.BlockSpec((dim, d_model), lambda b: (0, 0)),      # wq   (shared)
            pl.BlockSpec((1, d_model), lambda b: (0, 0)),        # bq   (shared)
            pl.BlockSpec((d_model, HK), lambda b: (0, 0)),       # wk block-diag
            pl.BlockSpec((1, HK), lambda b: (0, 0)),             # bk tiled
            pl.BlockSpec((HK, HK), lambda b: (0, 0)),            # per-head ones
            pl.BlockSpec((HK, dim), lambda b: (0, 0)),           # wv block-diag
            pl.BlockSpec((1, dim), lambda b: (0, 0)),            # bv tiled
        ],
        out_specs=pl.BlockSpec((None, N, dim), lambda b: (b, 0, 0)),
        compiler_params=pltpu.CompilerParams(
            dimension_semantics=("parallel",)),
    )(x, wq, bq2, wk_bd, bk_bd, ones_bd, wv_bd, bv_bd)


# ----------------------------- pure-JAX reference ------------------------------

def global_attention_ref(x, params, num_heads):
    B, N, dim = x.shape
    d_model = params["wq"].shape[1]
    dq = d_model // num_heads
    q = jnp.dot(x, params["wq"], preferred_element_type=jnp.float32) + params["bq"]
    q = q.reshape(B, N, num_heads, dq).transpose(0, 2, 1, 3)            # (B,H,N,dq)
    attn = jnp.einsum("bhnd,dk->bhnk", q, params["wk"],
                      preferred_element_type=jnp.float32) + params["bk"]
    attn = jax.nn.softmax(attn, axis=-2)
    attn = attn / (EPS + jnp.sum(attn, axis=-1, keepdims=True))
    out = jnp.einsum("bhnk,kv->bhnv", attn, params["wv"],
                     preferred_element_type=jnp.float32) + params["bv"]
    return out.transpose(0, 2, 1, 3).reshape(B, N, dim)


# ----------------------------- deterministic params ----------------------------

def make_params(key, dim, num_heads, d_model=256, k_mem=64, dtype=jnp.float32):
    """nn.Linear-style init; weights stored pre-transposed as (in, out)."""
    dq = d_model // num_heads
    dv = dim // num_heads
    ks = jax.random.split(key, 6)

    def lin_w(k, fan_in, fan_out):
        bound = 1.0 / math.sqrt(fan_in)
        return jax.random.uniform(k, (fan_in, fan_out), dtype, -bound, bound)

    def lin_b(k, fan_in, fan_out):
        bound = 1.0 / math.sqrt(fan_in)
        return jax.random.uniform(k, (fan_out,), dtype, -bound, bound)

    return dict(
        wq=lin_w(ks[0], dim, d_model), bq=lin_b(ks[1], dim, d_model),
        wk=lin_w(ks[2], dq, k_mem),    bk=lin_b(ks[3], dq, k_mem),
        wv=lin_w(ks[4], k_mem, dv),    bv=lin_b(ks[5], k_mem, dv),
    )


# ----------------------------- main ---------------------------------------------

if __name__ == "__main__":
    B, N, dim, H = 2, 8, 32, 4        # batch, n_amr tokens, feature dim, heads
    key = jax.random.PRNGKey(0)
    kx, kp = jax.random.split(key)
    x = jax.random.normal(kx, (B, N, dim), dtype=jnp.float32)
    params = make_params(kp, dim, H)

    out = jax.block_until_ready(global_attention(x, params, H))
    assert out.shape == (B, N, dim), out.shape

    ref = global_attention_ref(x, params, H)
    if not jnp.allclose(out, ref, rtol=2e-3, atol=2e-3):
        max_err = float(jnp.max(jnp.abs(out - ref)))
        raise AssertionError(f"Pallas kernel mismatch vs reference, max abs err={max_err}")

    print("KERNEL_OK")
</pallas_src>

<mosaic_0001>
module attributes {stable_mosaic.version = 11 : i64} {
  func.func @_global_attn_kernel(%arg0: i32, %arg1: memref<1x8x32xf32, #tpu.memory_space<vmem>>, %arg2: memref<32x256xf32, #tpu.memory_space<vmem>>, %arg3: memref<1x256xf32, #tpu.memory_space<vmem>>, %arg4: memref<256x256xf32, #tpu.memory_space<vmem>>, %arg5: memref<1x256xf32, #tpu.memory_space<vmem>>, %arg6: memref<256x256xf32, #tpu.memory_space<vmem>>, %arg7: memref<256x32xf32, #tpu.memory_space<vmem>>, %arg8: memref<1x32xf32, #tpu.memory_space<vmem>>, %arg9: memref<1x8x32xf32, #tpu.memory_space<vmem>>) attributes {dimension_semantics = [#tpu.dimension_semantics<parallel>], iteration_bounds = array<i64: 2>, scalar_prefetch = 0 : i64, scratch_operands = 0 : i64, tpu.core_type = #tpu.core_type<tc>, window_params = [{transform_indices = @transform_0, window_bounds = array<i64: 1, 8, 32>}, {pipeline_mode = #tpu.pipeline_mode<synchronous>, transform_indices = @transform_1, window_bounds = array<i64: 32, 256>}, {pipeline_mode = #tpu.pipeline_mode<synchronous>, transform_indices = @transform_2, window_bounds = array<i64: 1, 256>}, {pipeline_mode = #tpu.pipeline_mode<synchronous>, transform_indices = @transform_3, window_bounds = array<i64: 256, 256>}, {pipeline_mode = #tpu.pipeline_mode<synchronous>, transform_indices = @transform_4, window_bounds = array<i64: 1, 256>}, {pipeline_mode = #tpu.pipeline_mode<synchronous>, transform_indices = @transform_5, window_bounds = array<i64: 256, 256>}, {pipeline_mode = #tpu.pipeline_mode<synchronous>, transform_indices = @transform_6, window_bounds = array<i64: 256, 32>}, {pipeline_mode = #tpu.pipeline_mode<synchronous>, transform_indices = @transform_7, window_bounds = array<i64: 1, 32>}, {transform_indices = @transform_8, window_bounds = array<i64: 1, 8, 32>}]} {
    %c0 = arith.constant 0 : index
    %c0_0 = arith.constant 0 : index
    %c0_1 = arith.constant 0 : index
    %0 = vector.load %arg1[%c0, %c0_0, %c0_1] : memref<1x8x32xf32, #tpu.memory_space<vmem>>, vector<1x8x32xf32>
    %1 = vector.shape_cast %0 : vector<1x8x32xf32> to vector<8x32xf32>
    %c0_2 = arith.constant 0 : index
    %c0_3 = arith.constant 0 : index
    %2 = vector.load %arg2[%c0_2, %c0_3] : memref<32x256xf32, #tpu.memory_space<vmem>>, vector<32x256xf32>
    %cst = arith.constant dense<0.000000e+00> : vector<8x256xf32>
    %3 = tpu.matmul %1, %2, %cst {dimension_numbers = #tpu.dot_dimension_numbers<[1], [0], [0], [1], [0, 0, 1, 1], [], []>} : vector<8x32xf32>, vector<32x256xf32>, vector<8x256xf32> -> vector<8x256xf32>
    %c0_4 = arith.constant 0 : index
    %c0_5 = arith.constant 0 : index
    %4 = vector.load %arg3[%c0_4, %c0_5] : memref<1x256xf32, #tpu.memory_space<vmem>>, vector<1x256xf32>
    %5 = vector.broadcast %4 : vector<1x256xf32> to vector<8x256xf32>
    %6 = arith.addf %3, %5 : vector<8x256xf32>
    %c0_6 = arith.constant 0 : index
    %c0_7 = arith.constant 0 : index
    %7 = vector.load %arg4[%c0_6, %c0_7] : memref<256x256xf32, #tpu.memory_space<vmem>>, vector<256x256xf32>
    %cst_8 = arith.constant dense<0.000000e+00> : vector<8x256xf32>
    %8 = tpu.matmul %6, %7, %cst_8 {dimension_numbers = #tpu.dot_dimension_numbers<[1], [0], [0], [1], [0, 0, 1, 1], [], []>} : vector<8x256xf32>, vector<256x256xf32>, vector<8x256xf32> -> vector<8x256xf32>
    %c0_9 = arith.constant 0 : index
    %c0_10 = arith.constant 0 : index
    %9 = vector.load %arg5[%c0_9, %c0_10] : memref<1x256xf32, #tpu.memory_space<vmem>>, vector<1x256xf32>
    %10 = vector.broadcast %9 : vector<1x256xf32> to vector<8x256xf32>
    %11 = arith.addf %8, %10 : vector<8x256xf32>
    %cst_11 = arith.constant dense<0xFF800000> : vector<256xf32>
    %12 = vector.multi_reduction <maximumf>, %11, %cst_11 [0] : vector<8x256xf32> to vector<256xf32>
    %13 = vector.shape_cast %12 : vector<256xf32> to vector<1x256xf32>
    %14 = vector.broadcast %13 : vector<1x256xf32> to vector<8x256xf32>
    %15 = arith.subf %11, %14 : vector<8x256xf32>
    %16 = math.exp %15 : vector<8x256xf32>
    %cst_12 = arith.constant dense<0.000000e+00> : vector<256xf32>
    %17 = vector.multi_reduction <add>, %16, %cst_12 [0] : vector<8x256xf32> to vector<256xf32>
    %18 = vector.shape_cast %17 : vector<256xf32> to vector<1x256xf32>
    %19 = tpu.reciprocal %18 {approx = true} : vector<1x256xf32> -> vector<1x256xf32>
    %20 = vector.broadcast %19 : vector<1x256xf32> to vector<8x256xf32>
    %21 = arith.mulf %16, %20 : vector<8x256xf32>
    %c0_13 = arith.constant 0 : index
    %c0_14 = arith.constant 0 : index
    %22 = vector.load %arg6[%c0_13, %c0_14] : memref<256x256xf32, #tpu.memory_space<vmem>>, vector<256x256xf32>
    %cst_15 = arith.constant dense<0.000000e+00> : vector<8x256xf32>
    %23 = tpu.matmul %21, %22, %cst_15 {dimension_numbers = #tpu.dot_dimension_numbers<[1], [0], [0], [1], [0, 0, 1, 1], [], []>} : vector<8x256xf32>, vector<256x256xf32>, vector<8x256xf32> -> vector<8x256xf32>
    %cst_16 = arith.constant 9.99999971E-10 : f32
    %24 = vector.broadcast %cst_16 : f32 to vector<8x256xf32>
    %25 = arith.addf %24, %23 : vector<8x256xf32>
    %26 = tpu.reciprocal %25 {approx = true} : vector<8x256xf32> -> vector<8x256xf32>
    %27 = arith.mulf %21, %26 : vector<8x256xf32>
    %c0_17 = arith.constant 0 : index
    %c0_18 = arith.constant 0 : index
    %28 = vector.load %arg7[%c0_17, %c0_18] : memref<256x32xf32, #tpu.memory_space<vmem>>, vector<256x32xf32>
    %cst_19 = arith.constant dense<0.000000e+00> : vector<8x32xf32>
    %29 = tpu.matmul %27, %28, %cst_19 {dimension_numbers = #tpu.dot_dimension_numbers<[1], [0], [0], [1], [0, 0, 1, 1], [], []>} : vector<8x256xf32>, vector<256x32xf32>, vector<8x32xf32> -> vector<8x32xf32>
    %c0_20 = arith.constant 0 : index
    %c0_21 = arith.constant 0 : index
    %30 = vector.load %arg8[%c0_20, %c0_21] : memref<1x32xf32, #tpu.memory_space<vmem>>, vector<1x32xf32>
    %31 = vector.broadcast %30 : vector<1x32xf32> to vector<8x32xf32>
    %32 = arith.addf %29, %31 : vector<8x32xf32>
    %c0_22 = arith.constant 0 : index
    %c0_23 = arith.constant 0 : index
    %c0_24 = arith.constant 0 : index
    %33 = vector.load %arg9[%c0_22, %c0_23, %c0_24] : memref<1x8x32xf32, #tpu.memory_space<vmem>>, vector<1x8x32xf32>
    %34 = vector.shape_cast %33 : vector<1x8x32xf32> to vector<8x32xf32>
    %35 = vector.shape_cast %32 : vector<8x32xf32> to vector<1x8x32xf32>
    tpu.vector_store %arg9[%c0_22, %c0_23, %c0_24], %35 {strides = array<i32>} : memref<1x8x32xf32, #tpu.memory_space<vmem>>, vector<1x8x32xf32>,
    return
  }
  func.func @transform_0(%arg0: i32) -> (i32, i32, i32) {
    %c0_i32 = arith.constant 0 : i32
    %c0_i32_0 = arith.constant 0 : i32
    %c0_i32_1 = arith.constant 0 : i32
    return %arg0, %c0_i32, %c0_i32_0 : i32, i32, i32
  }
  func.func @transform_1(%arg0: i32) -> (i32, i32) {
    %c0_i32 = arith.constant 0 : i32
    %c0_i32_0 = arith.constant 0 : i32
    %c0_i32_1 = arith.constant 0 : i32
    return %c0_i32, %c0_i32_0 : i32, i32
  }
  func.func @transform_2(%arg0: i32) -> (i32, i32) {
    %c0_i32 = arith.constant 0 : i32
    %c0_i32_0 = arith.constant 0 : i32
    %c0_i32_1 = arith.constant 0 : i32
    return %c0_i32, %c0_i32_0 : i32, i32
  }
  func.func @transform_3(%arg0: i32) -> (i32, i32) {
    %c0_i32 = arith.constant 0 : i32
    %c0_i32_0 = arith.constant 0 : i32
    %c0_i32_1 = arith.constant 0 : i32
    return %c0_i32, %c0_i32_0 : i32, i32
  }
  func.func @transform_4(%arg0: i32) -> (i32, i32) {
    %c0_i32 = arith.constant 0 : i32
    %c0_i32_0 = arith.constant 0 : i32
    %c0_i32_1 = arith.constant 0 : i32
    return %c0_i32, %c0_i32_0 : i32, i32
  }
  func.func @transform_5(%arg0: i32) -> (i32, i32) {
    %c0_i32 = arith.constant 0 : i32
    %c0_i32_0 = arith.constant 0 : i32
    %c0_i32_1 = arith.constant 0 : i32
    return %c0_i32, %c0_i32_0 : i32, i32
  }
  func.func @transform_6(%arg0: i32) -> (i32, i32) {
    %c0_i32 = arith.constant 0 : i32
    %c0_i32_0 = arith.constant 0 : i32
    %c0_i32_1 = arith.constant 0 : i32
    return %c0_i32, %c0_i32_0 : i32, i32
  }
  func.func @transform_7(%arg0: i32) -> (i32, i32) {
    %c0_i32 = arith.constant 0 : i32
    %c0_i32_0 = arith.constant 0 : i32
    %c0_i32_1 = arith.constant 0 : i32
    return %c0_i32, %c0_i32_0 : i32, i32
  }
  func.func @transform_8(%arg0: i32) -> (i32, i32, i32) {
    %c0_i32 = arith.constant 0 : i32
    %c0_i32_0 = arith.constant 0 : i32
    %c0_i32_1 = arith.constant 0 : i32
    return %arg0, %c0_i32, %c0_i32_0 : i32, i32, i32
  }
}

</mosaic_0001>

<llo_original>
// kernel: tpu_custom_call.1
$region0: #{tpu_custom_call.1}
  #allocation0 [shape = 'u32[]', space=smem, size = 0x4, offset = 0x4, fixed_abs, tag = 'smem constant byte address 0x4 - core index']
  #allocation1 [shape = 'u32[72,128]{1,0:T(1,128)}', space=vmem, size = 0x9000, scoped, tag = 'internal scratch']
  %s0 = inlined_call_operand.vmem [shape: f32[2,8,32], index: 0, kind: input, shape index: {}]
  %s1 = inlined_call_operand.vmem [shape: f32[32,256], index: 1, kind: input, shape index: {}]
  %s2 = inlined_call_operand.vmem [shape: f32[1,256], index: 2, kind: input, shape index: {}]
  %s3 = inlined_call_operand.hbm [shape: f32[256,256], index: 3, kind: input, shape index: {}]
  %s4 = inlined_call_operand.vmem [shape: f32[1,256], index: 4, kind: input, shape index: {}]
  %s5 = inlined_call_operand.hbm [shape: f32[256,256], index: 5, kind: input, shape index: {}]
  %s6 = inlined_call_operand.vmem [shape: f32[256,32], index: 6, kind: input, shape index: {}]
  %s7 = inlined_call_operand.vmem [shape: f32[1,32], index: 7, kind: input, shape index: {}]
  %s8 = inlined_call_operand.hbm [shape: f32[2,8,32], index: 8, kind: output, shape index: {}]
  %s9 = sld [smem:[#allocation0]]
  $region73: #{tpu_custom_call.1} parent=0
    _
  %s11 = ssub.s32 1, %s9
  %s12 = scalar_select 0, %s11, %s9
  $region1: #{tpu_custom_call.1} parent=0
    #allocation2 [shape = 'u8[262144]{0}', space=vmem, size = 0x40000, scoped, tag = 'input window, operand 3, single buffered']
    #allocation3 [shape = 's32[2]{0}', space=sflag, size = 0x8, scoped, tag = 'scoped memory for tpu_custom_call.1']
    #allocation4 [shape = 's32[2]{0}', space=sflag, size = 0x8, scoped, tag = 'scoped memory for tpu_custom_call.1']
    #allocation5 [shape = 'u8[262144]{0}', space=vmem, size = 0x40000, scoped, tag = 'input window, operand 5, single buffered']
    #allocation6 [shape = 's32[1]{0}', space=sflag, size = 0x4, scoped, tag = 'scoped memory for tpu_custom_call.1']
    #allocation7 [shape = 'u8[8192]{0}', space=vmem, size = 0x2000, scoped, tag = 'output window, operand 0']
    %13 = vsyncpa [#allocation3], 0
    %14 = vsyncpa [#allocation6], 0
    %15 = vsyncpa [#allocation4], 0
    %s16 = scalar_lea.sflag [#allocation4], 1
    %17 = vsyncpa %s16, 0
    loop: start=0, step=1, limit=4
    $region2: #{tpu_custom_call.1} parent=1 // loop_pre_header
      _
    $region3: #{tpu_custom_call.1} parent=1 // loop_header
      %s19 = sphi 0, %s23
      %p20 = scmp.ge.s32.totalorder %s19, 4
      %s29 = sphi 0, %s31
      %s32 = sphi 0, %s29
      %s33 = sphi 0, %s32
      %s49 = sphi 0, %s33
      %s53 = sphi 0, %s53
      %s55 = sphi 0, %s53
      %s56 = sphi 0, %s55
      %s70 = sphi 0, %s56
      %s74 = sphi 0, %s74
      %s76 = sphi 0, %s74
      %s77 = sphi 0, %s76
      %s91 = sphi 0, %s77
      %s95 = sphi 0, %s95
      %s97 = sphi 0, %s95
      %s98 = sphi 0, %s97
      %s112 = sphi 0, %s98
      %s116 = sphi 0, %s116
      %s118 = sphi 0, %s116
      %s119 = sphi 0, %s118
      %s133 = sphi 0, %s119
      %s137 = sphi 0, %s137
      %s139 = sphi 0, %s137
      %s140 = sphi 0, %s139
      %s154 = sphi 0, %s140
      %s158 = sphi 0, %s158
      %s160 = sphi 0, %s158
      %s161 = sphi 0, %s160
      %s175 = sphi 0, %s161
      %s179 = sphi 0, %s179
      %s181 = sphi 0, %s179
      %s182 = sphi 0, %s181
      %s196 = sphi 0, %s182
      %s202 = sphi 0, %s204
      %s205 = sphi 0, %s202
      %s206 = sphi 0, %s205
      %s222 = sphi 0, %s206
    $region4: #{tpu_custom_call.1} parent=1 // loop_header_branch
      %22 = sbr.rel (%p20) target = $region8
    $region5: #{tpu_custom_call.1} parent=1 // loop_body
      %s24 = ssub.s32 %s19, 1
      %s25 = ssub.s32 %s19, 2
      %s26 = sadd.s32 %s19, 1
      %s27 = ssub.s32 %s19, %s26
      %p28 = scmp.eq.s32.totalorder %s27, 0
      %s30 = sadd.s32 %s29, 1
      %s31 = scalar_select %p28, %s29, %s30
      %p34 = pneg %p28
      %p35 = scmp.eq.s32.totalorder %s19, 1
      %p36 = por %p34, %p35
      %p37 = scmp.ne.s32.totalorder %s29, %s32
      %p38 = scmp.eq.s32.totalorder %s19, 0
      %p39 = por %p37, %p38
      %p40 = scmp.ne.s32.totalorder %s29, %s32
      %p41 = scmp.eq.s32.totalorder %s24, 1
      %p42 = por %p40, %p41
      %p43 = scmp.ne.s32.totalorder %s32, %s33
      %p44 = scmp.eq.s32.totalorder %s24, 0
      %p45 = por %p43, %p44
      %p46 = scmp.ne.s32.totalorder %s32, %s33
      %p47 = scmp.eq.s32.totalorder %s25, 1
      %p48 = por %p46, %p47
      %p50 = scmp.ne.s32.totalorder %s33, %s49
      %p51 = scmp.eq.s32.totalorder %s25, 0
      %p52 = por %p50, %p51
      %s54 = sadd.s32 %s53, 1
      %p57 = scmp.eq.s32.totalorder %s19, 1
      %p58 = scmp.ne.s32.totalorder %s53, %s55
      %p59 = scmp.eq.s32.totalorder %s19, 0
      %p60 = por %p58, %p59
      %p61 = scmp.ne.s32.totalorder %s53, %s55
      %p62 = scmp.eq.s32.totalorder %s24, 1
      %p63 = por %p61, %p62
      %p64 = scmp.ne.s32.totalorder %s55, %s56
      %p65 = scmp.eq.s32.totalorder %s24, 0
      %p66 = por %p64, %p65
      %p67 = scmp.ne.s32.totalorder %s55, %s56
      %p68 = scmp.eq.s32.totalorder %s25, 1
      %p69 = por %p67, %p68
      %p71 = scmp.ne.s32.totalorder %s56, %s70
      %p72 = scmp.eq.s32.totalorder %s25, 0
      %p73 = por %p71, %p72
      %s75 = sadd.s32 %s74, 1
      %p78 = scmp.eq.s32.totalorder %s19, 1
      %p79 = scmp.ne.s32.totalorder %s74, %s76
      %p80 = scmp.eq.s32.totalorder %s19, 0
      %p81 = por %p79, %p80
      %p82 = scmp.ne.s32.totalorder %s74, %s76
      %p83 = scmp.eq.s32.totalorder %s24, 1
      %p84 = por %p82, %p83
      %p85 = scmp.ne.s32.totalorder %s76, %s77
      %p86 = scmp.eq.s32.totalorder %s24, 0
      %p87 = por %p85, %p86
      %p88 = scmp.ne.s32.totalorder %s76, %s77
      %p89 = scmp.eq.s32.totalorder %s25, 1
      %p90 = por %p88, %p89
      %p92 = scmp.ne.s32.totalorder %s77, %s91
      %p93 = scmp.eq.s32.totalorder %s25, 0
      %p94 = por %p92, %p93
      %s96 = sadd.s32 %s95, 1
      %p99 = scmp.eq.s32.totalorder %s19, 1
      %p100 = scmp.ne.s32.totalorder %s95, %s97
      %p101 = scmp.eq.s32.totalorder %s19, 0
      %p102 = por %p100, %p101
      %p103 = scmp.ne.s32.totalorder %s95, %s97
      %p104 = scmp.eq.s32.totalorder %s24, 1
      %p105 = por %p103, %p104
      %p106 = scmp.ne.s32.totalorder %s97, %s98
      %p107 = scmp.eq.s32.totalorder %s24, 0
      %p108 = por %p106, %p107
      %p109 = scmp.ne.s32.totalorder %s97, %s98
      %p110 = scmp.eq.s32.totalorder %s25, 1
      %p111 = por %p109, %p110
      %p113 = scmp.ne.s32.totalorder %s98, %s112
      %p114 = scmp.eq.s32.totalorder %s25, 0
      %p115 = por %p113, %p114
      %s117 = sadd.s32 %s116, 1
      %p120 = scmp.eq.s32.totalorder %s19, 1
      %p121 = scmp.ne.s32.totalorder %s116, %s118
      %p122 = scmp.eq.s32.totalorder %s19, 0
      %p123 = por %p121, %p122
      %p124 = scmp.ne.s32.totalorder %s116, %s118
      %p125 = scmp.eq.s32.totalorder %s24, 1
      %p126 = por %p124, %p125
      %p127 = scmp.ne.s32.totalorder %s118, %s119
      %p128 = scmp.eq.s32.totalorder %s24, 0
      %p129 = por %p127, %p128
      %p130 = scmp.ne.s32.totalorder %s118, %s119
      %p131 = scmp.eq.s32.totalorder %s25, 1
      %p132 = por %p130, %p131
      %p134 = scmp.ne.s32.totalorder %s119, %s133
      %p135 = scmp.eq.s32.totalorder %s25, 0
      %p136 = por %p134, %p135
      %s138 = sadd.s32 %s137, 1
      %p141 = scmp.eq.s32.totalorder %s19, 1
      %p142 = scmp.ne.s32.totalorder %s137, %s139
      %p143 = scmp.eq.s32.totalorder %s19, 0
      %p144 = por %p142, %p143
      %p145 = scmp.ne.s32.totalorder %s137, %s139
      %p146 = scmp.eq.s32.totalorder %s24, 1
      %p147 = por %p145, %p146
      %p148 = scmp.ne.s32.totalorder %s139, %s140
      %p149 = scmp.eq.s32.totalorder %s24, 0
      %p150 = por %p148, %p149
      %p151 = scmp.ne.s32.totalorder %s139, %s140
      %p152 = scmp.eq.s32.totalorder %s25, 1
      %p153 = por %p151, %p152
      %p155 = scmp.ne.s32.totalorder %s140, %s154
      %p156 = scmp.eq.s32.totalorder %s25, 0
      %p157 = por %p155, %p156
      %s159 = sadd.s32 %s158, 1
      %p162 = scmp.eq.s32.totalorder %s19, 1
      %p163 = scmp.ne.s32.totalorder %s158, %s160
      %p164 = scmp.eq.s32.totalorder %s19, 0
      %p165 = por %p163, %p164
      %p166 = scmp.ne.s32.totalorder %s158, %s160
      %p167 = scmp.eq.s32.totalorder %s24, 1
      %p168 = por %p166, %p167
      %p169 = scmp.ne.s32.totalorder %s160, %s161
      %p170 = scmp.eq.s32.totalorder %s24, 0
      %p171 = por %p169, %p170
      %p172 = scmp.ne.s32.totalorder %s160, %s161
      %p173 = scmp.eq.s32.totalorder %s25, 1
      %p174 = por %p172, %p173
      %p176 = scmp.ne.s32.totalorder %s161, %s175
      %p177 = scmp.eq.s32.totalorder %s25, 0
      %p178 = por %p176, %p177
      %s180 = sadd.s32 %s179, 1
      %p183 = scmp.eq.s32.totalorder %s19, 1
      %p184 = scmp.ne.s32.totalorder %s179, %s181
      %p185 = scmp.eq.s32.totalorder %s19, 0
      %p186 = por %p184, %p185
      %p187 = scmp.ne.s32.totalorder %s179, %s181
      %p188 = scmp.eq.s32.totalorder %s24, 1
      %p189 = por %p187, %p188
      %p190 = scmp.ne.s32.totalorder %s181, %s182
      %p191 = scmp.eq.s32.totalorder %s24, 0
      %p192 = por %p190, %p191
      %p193 = scmp.ne.s32.totalorder %s181, %s182
      %p194 = scmp.eq.s32.totalorder %s25, 1
      %p195 = por %p193, %p194
      %p197 = scmp.ne.s32.totalorder %s182, %s196
      %p198 = scmp.eq.s32.totalorder %s25, 0
      %p199 = por %p197, %p198
      %s200 = ssub.s32 %s19, %s26
      %p201 = scmp.eq.s32.totalorder %s200, 0
      %s203 = sadd.s32 %s202, 1
      %s204 = scalar_select %p201, %s202, %s203
      %p207 = pneg %p201
      %p208 = scmp.eq.s32.totalorder %s19, 1
      %p209 = por %p207, %p208
      %p210 = scmp.ne.s32.totalorder %s202, %s205
      %p211 = scmp.eq.s32.totalorder %s19, 0
      %p212 = por %p210, %p211
      %p213 = scmp.ne.s32.totalorder %s202, %s205
      %p214 = scmp.eq.s32.totalorder %s24, 1
      %p215 = por %p213, %p214
      %p216 = scmp.ne.s32.totalorder %s205, %s206
      %p217 = scmp.eq.s32.totalorder %s24, 0
      %p218 = por %p216, %p217
      %p219 = scmp.ne.s32.totalorder %s205, %s206
      %p220 = scmp.eq.s32.totalorder %s25, 1
      %p221 = por %p219, %p220
      %p223 = scmp.ne.s32.totalorder %s206, %s222
      %p224 = scmp.eq.s32.totalorder %s25, 0
      %p225 = por %p223, %p224
      %p226 = scmp.le.s32.totalorder 1, %s19
      %p227 = scmp.lt.s32.totalorder %s19, 3
      %p228 = pnand %p226, %p227
      %p229 = pneg %p228
      // Predicated region
      $region9: #{tpu_custom_call.1} parent=5 // pred_check
        _
      $region10: #{tpu_custom_call.1} parent=5 // pred_check_branch
        %231 = sbr.rel (%p228) target = $region12
      $region11: #{tpu_custom_call.1} parent=5 // pred_region
        %s232 = ssub.s32 %s19, 1
        // Predicated region
        $region13: #{tpu_custom_call.1} parent=11 // pred_check
          %p233 = pneg %p66
        $region14: #{tpu_custom_call.1} parent=11 // pred_check_branch
          %235 = sbr.rel (%p233) target = $region16
        $region15: #{tpu_custom_call.1} parent=11 // pred_region
          _
        $region16: #{tpu_custom_call.1} parent=11 // pred_fallthru
          _
        // Predicated region
        $region17: #{tpu_custom_call.1} parent=11 // pred_check
          %p236 = pneg %p87
        $region18: #{tpu_custom_call.1} parent=11 // pred_check_branch
          %238 = sbr.rel (%p236) target = $region20
        $region19: #{tpu_custom_call.1} parent=11 // pred_region
          _
        $region20: #{tpu_custom_call.1} parent=11 // pred_fallthru
          _
        // Predicated region
        $region21: #{tpu_custom_call.1} parent=11 // pred_check
          %p239 = pneg %p108
        $region22: #{tpu_custom_call.1} parent=11 // pred_check_branch
          %241 = sbr.rel (%p239) target = $region24
        $region23: #{tpu_custom_call.1} parent=11 // pred_region
          %243 = vsyncadd [#allocation3], 0
          %s244 = sshll.u32 %s3, 4
          %s245 = int_to_ptr.hbm [resolvable:$true] %s244
          %s246 = sshll.u32 [#allocation2], 4
          %s247 = int_to_ptr.vmem [resolvable:$true] %s246
          %252 = dma.hbm_to_vmem [thread:$0]  %s245, 8192, %s247, [#allocation3], 256, 256, 16
        $region24: #{tpu_custom_call.1} parent=11 // pred_fallthru
          _
        // Predicated region
        $region25: #{tpu_custom_call.1} parent=11 // pred_check
          %p253 = pneg %p129
        $region26: #{tpu_custom_call.1} parent=11 // pred_check_branch
          %255 = sbr.rel (%p253) target = $region28
        $region27: #{tpu_custom_call.1} parent=11 // pred_region
          _
        $region28: #{tpu_custom_call.1} parent=11 // pred_fallthru
          _
        // Predicated region
        $region29: #{tpu_custom_call.1} parent=11 // pred_check
          %p256 = pneg %p150
        $region30: #{tpu_custom_call.1} parent=11 // pred_check_branch
          %258 = sbr.rel (%p256) target = $region32
        $region31: #{tpu_custom_call.1} parent=11 // pred_region
          %260 = vsyncadd [#allocation6], 0
          %s261 = sshll.u32 %s5, 4
          %s262 = int_to_ptr.hbm [resolvable:$true] %s261
          %s263 = sshll.u32 [#allocation5], 4
          %s264 = int_to_ptr.vmem [resolvable:$true] %s263
          %269 = dma.hbm_to_vmem [thread:$0]  %s262, 8192, %s264, [#allocation6], 256, 256, 16
        $region32: #{tpu_custom_call.1} parent=11 // pred_fallthru
          _
        // Predicated region
        $region33: #{tpu_custom_call.1} parent=11 // pred_check
          %p270 = pneg %p171
        $region34: #{tpu_custom_call.1} parent=11 // pred_check_branch
          %272 = sbr.rel (%p270) target = $region36
        $region35: #{tpu_custom_call.1} parent=11 // pred_region
          _
        $region36: #{tpu_custom_call.1} parent=11 // pred_fallthru
          _
        // Predicated region
        $region37: #{tpu_custom_call.1} parent=11 // pred_check
          %p273 = pneg %p192
        $region38: #{tpu_custom_call.1} parent=11 // pred_check_branch
          %275 = sbr.rel (%p273) target = $region40
        $region39: #{tpu_custom_call.1} parent=11 // pred_region
          _
        $region40: #{tpu_custom_call.1} parent=11 // pred_fallthru
          _
      $region12: #{tpu_custom_call.1} parent=5 // pred_fallthru
        _
      %p276 = scmp.lt.s32.totalorder %s19, 2
      // Predicated region
      $region41: #{tpu_custom_call.1} parent=5 // pred_check
        %p277 = pneg %p276
      $region42: #{tpu_custom_call.1} parent=5 // pred_check_branch
        %279 = sbr.rel (%p277) target = $region44
      $region43: #{tpu_custom_call.1} parent=5 // pred_region
        // Predicated region
        $region45: #{tpu_custom_call.1} parent=43 // pred_check
          %p280 = pneg %p39
        $region46: #{tpu_custom_call.1} parent=43 // pred_check_branch
          %282 = sbr.rel (%p280) target = $region48
        $region47: #{tpu_custom_call.1} parent=43 // pred_region
          %p283 = scmp.lt.s32.totalorder %s19, 1
          %s284 = scalar_select %p283, %s19, 1
          %s285 = smul.addr %s284, 8
          %s286 = scalar_lea.vmem %s0, %s285
        $region48: #{tpu_custom_call.1} parent=43 // pred_fallthru
          _
      $region44: #{tpu_custom_call.1} parent=5 // pred_fallthru
        _
      %p287 = scmp.le.s32.totalorder 1, %s19
      %p288 = scmp.lt.s32.totalorder %s19, 3
      %p289 = pnand %p287, %p288
      %p290 = pneg %p289
      // Predicated region
      $region49: #{tpu_custom_call.1} parent=5 // pred_check
        _
      $region50: #{tpu_custom_call.1} parent=5 // pred_check_branch
        %292 = sbr.rel (%p289) target = $region52
      $region51: #{tpu_custom_call.1} parent=5 // pred_region
        %s293 = ssub.s32 %s19, 1
        // Predicated region
        $region53: #{tpu_custom_call.1} parent=51 // pred_check
          %p294 = pneg %p108
        $region54: #{tpu_custom_call.1} parent=51 // pred_check_branch
          %296 = sbr.rel (%p294) target = $region56
        $region55: #{tpu_custom_call.1} parent=51 // pred_region
          %298 = dma.done [#allocation3], 8192
        $region56: #{tpu_custom_call.1} parent=51 // pred_fallthru
          _
        // Predicated region
        $region57: #{tpu_custom_call.1} parent=51 // pred_check
          %p299 = pneg %p150
        $region58: #{tpu_custom_call.1} parent=51 // pred_check_branch
          %301 = sbr.rel (%p299) target = $region60
        $region59: #{tpu_custom_call.1} parent=51 // pred_region
          %303 = dma.done [#allocation6], 8192
        $region60: #{tpu_custom_call.1} parent=51 // pred_fallthru
          _
        %p304 = scmp.lt.s32.totalorder %s24, 1
        %s305 = scalar_select %p304, %s24, 1
        %s306 = smul.addr %s305, 8
        %s307 = scalar_lea.vmem %s0, %s306
        %p308 = pneg %p45
        %p309 = pneg %p42
        %p310 = pneg %p66
        %p311 = pneg %p63
        %p312 = pneg %p87
        %p313 = pneg %p84
        %p314 = pneg %p108
        %p315 = pneg %p105
        %p316 = pneg %p129
        %p317 = pneg %p126
        %p318 = pneg %p150
        %p319 = pneg %p147
        %p320 = pneg %p171
        %p321 = pneg %p168
        %p322 = pneg %p192
        %p323 = pneg %p189
        %p324 = pneg %p218
        %p325 = pneg %p215
        %s326 = sand.u32 %s205, 1
        %s327 = scalar_lea.sflag [#allocation4], %s326
        %s328 = sand.u32 %s205, 1
        %s329 = smul.addr %s328, 8
        %s330 = scalar_lea.vmem [#allocation7], %s329
        %p331 = scmp.lt.s32.totalorder %s24, 1
        %s332 = scalar_select %p331, %s24, 1
        %s333 = smul.addr %s332, 8
        %s334 = scalar_lea.vmem %s0, %s333
        %v335 = vld [vmem:[%s334] sm:$0xff]
        %v336 = vld [vmem:[%s1] sm:$0xff]
        %v337 = vld [vmem:[%s1 + $0x8] sm:$0xff]
        %v338 = vld [vmem:[%s1 + $0x10] sm:$0xff]
        %v339 = vld [vmem:[%s1 + $0x18] sm:$0xff]
        %v340 = vld [vmem:[%s1 + $0x20] sm:$0xff]
        %v341 = vld [vmem:[%s1 + $0x28] sm:$0xff]
        %v342 = vld [vmem:[%s1 + $0x30] sm:$0xff]
        %v343 = vld [vmem:[%s1 + $0x38] sm:$0xff]
        %v344 = vld [vmem:[%s2] sm:$0x3]
        %v346 = vperm.slane %v344, 0
        %v347 = vperm.slane %v344, 1
        %vm350 = vcmask 261120
        %v352 = vsel %vm350, %v335, 0
        %354 = vmatpush.msra.mxu0 0.0
        %355 = vmatpush.msra.mxu0 0.0
        %356 = vmatpush.msra.mxu0 0.0
        %357 = vmatpush.msra.mxu0 0.0
        %358 = vmatpush.msra.mxu0 0.0
        %359 = vmatpush.msra.mxu0 0.0
        %360 = vmatpush.msra.mxu0 0.0
        %361 = vmatpush.msra.mxu0 0.0
        %362 = vmatpush.msra.mxu0 0.0
        %363 = vmatpush.msra.mxu0 0.0
        %364 = vmatpush.msra.mxu0 0.0
        %365 = vmatpush.msra.mxu0 0.0
        %366 = vmatpush.msra.mxu0 %v342
        %367 = vmatpush.msra.mxu0 %v340
        %368 = vmatpush.msra.mxu0 %v338
        %369 = vmatpush.msra.mxu0 %v336
        %370 = vmatmul.f32.gmra.mxu0 %v352
        %v371 = vpop.f32.mrf.mxu0
        %v372 = vadd.f32 %v346, %v371
        %373 = vdwg.mxu0
        %374 = vmatpush.msra.mxu0 0.0
        %375 = vmatpush.msra.mxu0 0.0
        %376 = vmatpush.msra.mxu0 0.0
        %377 = vmatpush.msra.mxu0 0.0
        %378 = vmatpush.msra.mxu0 0.0
        %379 = vmatpush.msra.mxu0 0.0
        %380 = vmatpush.msra.mxu0 0.0
        %381 = vmatpush.msra.mxu0 0.0
        %382 = vmatpush.msra.mxu0 0.0
        %383 = vmatpush.msra.mxu0 0.0
        %384 = vmatpush.msra.mxu0 0.0
        %385 = vmatpush.msra.mxu0 0.0
        %386 = vmatpush.msra.mxu0 %v343
        %387 = vmatpush.msra.mxu0 %v341
        %388 = vmatpush.msra.mxu0 %v339
        %389 = vmatpush.msra.mxu0 %v337
        %390 = vmatmul.f32.gmra.mxu0 %v352
        %v391 = vpop.f32.mrf.mxu0
        %v392 = vadd.f32 %v347, %v391
        %393 = vdwg.mxu0
        %v394 = vld [vmem:[#allocation2] sm:$0xff]
        %v395 = vld [vmem:[#allocation2 + $0x8] sm:$0xff]
        %v396 = vld [vmem:[#allocation2 + $0x10] sm:$0xff]
        %v397 = vld [vmem:[#allocation2 + $0x18] sm:$0xff]
        %v398 = vld [vmem:[#allocation2 + $0x20] sm:$0xff]
        %v399 = vld [vmem:[#allocation2 + $0x28] sm:$0xff]
        %v400 = vld [vmem:[#allocation2 + $0x30] sm:$0xff]
        %v401 = vld [vmem:[#allocation2 + $0x38] sm:$0xff]
        %v402 = vld [vmem:[#allocation2 + $0x40] sm:$0xff]
        %v403 = vld [vmem:[#allocation2 + $0x48] sm:$0xff]
        %v404 = vld [vmem:[#allocation2 + $0x50] sm:$0xff]
        %v405 = vld [vmem:[#allocation2 + $0x58] sm:$0xff]
        %v406 = vld [vmem:[#allocation2 + $0x60] sm:$0xff]
        %v407 = vld [vmem:[#allocation2 + $0x68] sm:$0xff]
        %v408 = vld [vmem:[#allocation2 + $0x70] sm:$0xff]
        %v409 = vld [vmem:[#allocation2 + $0x78] sm:$0xff]
        %v410 = vld [vmem:[#allocation2 + $0x80] sm:$0xff]
        %v411 = vld [vmem:[#allocation2 + $0x88] sm:$0xff]
        %v412 = vld [vmem:[#allocation2 + $0x90] sm:$0xff]
        %v413 = vld [vmem:[#allocation2 + $0x98] sm:$0xff]
        %v414 = vld [vmem:[#allocation2 + $0xa0] sm:$0xff]
        %v415 = vld [vmem:[#allocation2 + $0xa8] sm:$0xff]
        %v416 = vld [vmem:[#allocation2 + $0xb0] sm:$0xff]
        %v417 = vld [vmem:[#allocation2 + $0xb8] sm:$0xff]
        %v418 = vld [vmem:[#allocation2 + $0xc0] sm:$0xff]
        %v419 = vld [vmem:[#allocation2 + $0xc8] sm:$0xff]
        %v420 = vld [vmem:[#allocation2 + $0xd0] sm:$0xff]
        %v421 = vld [vmem:[#allocation2 + $0xd8] sm:$0xff]
        %v422 = vld [vmem:[#allocation2 + $0xe0] sm:$0xff]
        %v423 = vld [vmem:[#allocation2 + $0xe8] sm:$0xff]
        %v424 = vld [vmem:[#allocation2 + $0xf0] sm:$0xff]
        %v425 = vld [vmem:[#allocation2 + $0xf8] sm:$0xff]
        %v426 = vld [vmem:[#allocation2 + $0x100] sm:$0xff]
        %v427 = vld [vmem:[#allocation2 + $0x108] sm:$0xff]
        %v428 = vld [vmem:[#allocation2 + $0x110] sm:$0xff]
        %v429 = vld [vmem:[#allocation2 + $0x118] sm:$0xff]
        %v430 = vld [vmem:[#allocation2 + $0x120] sm:$0xff]
        %v431 = vld [vmem:[#allocation2 + $0x128] sm:$0xff]
        %v432 = vld [vmem:[#allocation2 + $0x130] sm:$0xff]
        %v433 = vld [vmem:[#allocation2 + $0x138] sm:$0xff]
        %v434 = vld [vmem:[#allocation2 + $0x140] sm:$0xff]
        %v435 = vld [vmem:[#allocation2 + $0x148] sm:$0xff]
        %v436 = vld [vmem:[#allocation2 + $0x150] sm:$0xff]
        %v437 = vld [vmem:[#allocation2 + $0x158] sm:$0xff]
        %v438 = vld [vmem:[#allocation2 + $0x160] sm:$0xff]
        %v439 = vld [vmem:[#allocation2 + $0x168] sm:$0xff]
        %v440 = vld [vmem:[#allocation2 + $0x170] sm:$0xff]
        %v441 = vld [vmem:[#allocation2 + $0x178] sm:$0xff]
        %v442 = vld [vmem:[#allocation2 + $0x180] sm:$0xff]
        %v443 = vld [vmem:[#allocation2 + $0x188] sm:$0xff]
        %v444 = vld [vmem:[#allocation2 + $0x190] sm:$0xff]
        %v445 = vld [vmem:[#allocation2 + $0x198] sm:$0xff]
        %v446 = vld [vmem:[#allocation2 + $0x1a0] sm:$0xff]
        %v447 = vld [vmem:[#allocation2 + $0x1a8] sm:$0xff]
        %v448 = vld [vmem:[#allocation2 + $0x1b0] sm:$0xff]
        %v449 = vld [vmem:[#allocation2 + $0x1b8] sm:$0xff]
        %v450 = vld [vmem:[#allocation2 + $0x1c0] sm:$0xff]
        %v451 = vld [vmem:[#allocation2 + $0x1c8] sm:$0xff]
        %v452 = vld [vmem:[#allocation2 + $0x1d0] sm:$0xff]
        %v453 = vld [vmem:[#allocation2 + $0x1d8] sm:$0xff]
        %v454 = vld [vmem:[#allocation2 + $0x1e0] sm:$0xff]
        %v455 = vld [vmem:[#allocation2 + $0x1e8] sm:$0xff]
        %v456 = vld [vmem:[#allocation2 + $0x1f0] sm:$0xff]
        %v457 = vld [vmem:[#allocation2 + $0x1f8] sm:$0xff]
        %v458 = vld [vmem:[%s4] sm:$0x3]
        %v460 = vperm.slane %v458, 0
        %v461 = vperm.slane %v458, 1
        %464 = vmatpush.msra.mxu0 %v424
        %465 = vmatpush.msra.mxu0 %v422
        %466 = vmatpush.msra.mxu0 %v420
        %467 = vmatpush.msra.mxu0 %v418
        %468 = vmatpush.msra.mxu0 %v416
        %469 = vmatpush.msra.mxu0 %v414
        %470 = vmatpush.msra.mxu0 %v412
        %471 = vmatpush.msra.mxu0 %v410
        %472 = vmatpush.msra.mxu0 %v408
        %473 = vmatpush.msra.mxu0 %v406
        %474 = vmatpush.msra.mxu0 %v404
        %475 = vmatpush.msra.mxu0 %v402
        %476 = vmatpush.msra.mxu0 %v400
        %477 = vmatpush.msra.mxu0 %v398
        %478 = vmatpush.msra.mxu0 %v396
        %479 = vmatpush.msra.mxu0 %v394
        %480 = vmatmul.f32.gmra.mxu0 %v372
        %v481 = vpop.f32.mrf.mxu0
        %v482 = vadd.f32 %v460, %v481
        %483 = vdwg.mxu0
        %484 = vmatpush.msra.mxu0 %v456
        %485 = vmatpush.msra.mxu0 %v454
        %486 = vmatpush.msra.mxu0 %v452
        %487 = vmatpush.msra.mxu0 %v450
        %488 = vmatpush.msra.mxu0 %v448
        %489 = vmatpush.msra.mxu0 %v446
        %490 = vmatpush.msra.mxu0 %v444
        %491 = vmatpush.msra.mxu0 %v442
        %492 = vmatpush.msra.mxu0 %v440
        %493 = vmatpush.msra.mxu0 %v438
        %494 = vmatpush.msra.mxu0 %v436
        %495 = vmatpush.msra.mxu0 %v434
        %496 = vmatpush.msra.mxu0 %v432
        %497 = vmatpush.msra.mxu0 %v430
        %498 = vmatpush.msra.mxu0 %v428
        %499 = vmatpush.msra.mxu0 %v426
        %500 = vmatmul.f32.gmra.mxu0 %v392
        %v501 = vpop.f32.mrf.mxu0
        %v502 = vadd.f32 %v482, %v501
        %503 = vdwg.mxu0
        %504 = vmatpush.msra.mxu0 %v425
        %505 = vmatpush.msra.mxu0 %v423
        %506 = vmatpush.msra.mxu0 %v421
        %507 = vmatpush.msra.mxu0 %v419
        %508 = vmatpush.msra.mxu0 %v417
        %509 = vmatpush.msra.mxu0 %v415
        %510 = vmatpush.msra.mxu0 %v413
        %511 = vmatpush.msra.mxu0 %v411
        %512 = vmatpush.msra.mxu0 %v409
        %513 = vmatpush.msra.mxu0 %v407
        %514 = vmatpush.msra.mxu0 %v405
        %515 = vmatpush.msra.mxu0 %v403
        %516 = vmatpush.msra.mxu0 %v401
        %517 = vmatpush.msra.mxu0 %v399
        %518 = vmatpush.msra.mxu0 %v397
        %519 = vmatpush.msra.mxu0 %v395
        %520 = vmatmul.f32.gmra.mxu0 %v372
        %v521 = vpop.f32.mrf.mxu0
        %v522 = vadd.f32 %v461, %v521
        %523 = vdwg.mxu0
        %524 = vmatpush.msra.mxu0 %v457
        %525 = vmatpush.msra.mxu0 %v455
        %526 = vmatpush.msra.mxu0 %v453
        %527 = vmatpush.msra.mxu0 %v451
        %528 = vmatpush.msra.mxu0 %v449
        %529 = vmatpush.msra.mxu0 %v447
        %530 = vmatpush.msra.mxu0 %v445
        %531 = vmatpush.msra.mxu0 %v443
        %532 = vmatpush.msra.mxu0 %v441
        %533 = vmatpush.msra.mxu0 %v439
        %534 = vmatpush.msra.mxu0 %v437
        %535 = vmatpush.msra.mxu0 %v435
        %536 = vmatpush.msra.mxu0 %v433
        %537 = vmatpush.msra.mxu0 %v431
        %538 = vmatpush.msra.mxu0 %v429
        %539 = vmatpush.msra.mxu0 %v427
        %540 = vmatmul.f32.gmra.mxu0 %v392
        %v541 = vpop.f32.mrf.mxu0
        %v542 = vadd.f32 %v522, %v541
        %543 = vdwg.mxu0
        %v544 = vrot.slane %v502, 4
        %v545 = vmax.f32 %v502, %v544
        %v546 = vrot.slane %v545, 2
        %v547 = vmax.f32 %v545, %v546
        %v548 = vrot.slane %v547, 1
        %v549 = vmax.f32 %v547, %v548
        %v550 = vrot.slane %v542, 4
        %v551 = vmax.f32 %v542, %v550
        %v552 = vrot.slane %v551, 2
        %v553 = vmax.f32 %v551, %v552
        %v554 = vrot.slane %v553, 1
        %v555 = vmax.f32 %v553, %v554
        %v556 = vsub.f32 %v502, %v549
        %v557 = vsub.f32 %v542, %v555
        %v558 = vmul.f32 %v556, 1.442695
        %v559 = vpow.pop %v558
        %v560 = vmul.f32 %v557, 1.442695
        %v561 = vpow.pop %v560
        %v562 = vrot.slane %v559, 4
        %v563 = vadd.f32 %v559, %v562
        %v564 = vrot.slane %v563, 2
        %v565 = vadd.f32 %v563, %v564
        %v566 = vrot.slane %v565, 1
        %v567 = vadd.f32 %v565, %v566
        %v568 = vrot.slane %v561, 4
        %v569 = vadd.f32 %v561, %v568
        %v570 = vrot.slane %v569, 2
        %v571 = vadd.f32 %v569, %v570
        %v572 = vrot.slane %v571, 1
        %v573 = vadd.f32 %v571, %v572
        %v574 = vrcp.pop %v567
        %v575 = vrcp.pop %v573
        %v576 = vmul.f32 %v559, %v574
        %v577 = vmul.f32 %v561, %v575
        %v578 = vld [vmem:[#allocation5] sm:$0xff]
        %v579 = vld [vmem:[#allocation5 + $0x8] sm:$0xff]
        %v580 = vld [vmem:[#allocation5 + $0x10] sm:$0xff]
        %v581 = vld [vmem:[#allocation5 + $0x18] sm:$0xff]
        %v582 = vld [vmem:[#allocation5 + $0x20] sm:$0xff]
        %v583 = vld [vmem:[#allocation5 + $0x28] sm:$0xff]
        %v584 = vld [vmem:[#allocation5 + $0x30] sm:$0xff]
        %v585 = vld [vmem:[#allocation5 + $0x38] sm:$0xff]
        %v586 = vld [vmem:[#allocation5 + $0x40] sm:$0xff]
        %v587 = vld [vmem:[#allocation5 + $0x48] sm:$0xff]
        %v588 = vld [vmem:[#allocation5 + $0x50] sm:$0xff]
        %v589 = vld [vmem:[#allocation5 + $0x58] sm:$0xff]
        %v590 = vld [vmem:[#allocation5 + $0x60] sm:$0xff]
        %v591 = vld [vmem:[#allocation5 + $0x68] sm:$0xff]
        %v592 = vld [vmem:[#allocation5 + $0x70] sm:$0xff]
        %v593 = vld [vmem:[#allocation5 + $0x78] sm:$0xff]
        %v594 = vld [vmem:[#allocation5 + $0x80] sm:$0xff]
        %v595 = vld [vmem:[#allocation5 + $0x88] sm:$0xff]
        %v596 = vld [vmem:[#allocation5 + $0x90] sm:$0xff]
        %v597 = vld [vmem:[#allocation5 + $0x98] sm:$0xff]
        %v598 = vld [vmem:[#allocation5 + $0xa0] sm:$0xff]
        %v599 = vld [vmem:[#allocation5 + $0xa8] sm:$0xff]
        %v600 = vld [vmem:[#allocation5 + $0xb0] sm:$0xff]
        %v601 = vld [vmem:[#allocation5 + $0xb8] sm:$0xff]
        %v602 = vld [vmem:[#allocation5 + $0xc0] sm:$0xff]
        %v603 = vld [vmem:[#allocation5 + $0xc8] sm:$0xff]
        %v604 = vld [vmem:[#allocation5 + $0xd0] sm:$0xff]
        %v605 = vld [vmem:[#allocation5 + $0xd8] sm:$0xff]
        %v606 = vld [vmem:[#allocation5 + $0xe0] sm:$0xff]
        %v607 = vld [vmem:[#allocation5 + $0xe8] sm:$0xff]
        %v608 = vld [vmem:[#allocation5 + $0xf0] sm:$0xff]
        %v609 = vld [vmem:[#allocation5 + $0xf8] sm:$0xff]
        %v610 = vld [vmem:[#allocation5 + $0x100] sm:$0xff]
        %v611 = vld [vmem:[#allocation5 + $0x108] sm:$0xff]
        %v612 = vld [vmem:[#allocation5 + $0x110] sm:$0xff]
        %v613 = vld [vmem:[#allocation5 + $0x118] sm:$0xff]
        %v614 = vld [vmem:[#allocation5 + $0x120] sm:$0xff]
        %v615 = vld [vmem:[#allocation5 + $0x128] sm:$0xff]
        %v616 = vld [vmem:[#allocation5 + $0x130] sm:$0xff]
        %v617 = vld [vmem:[#allocation5 + $0x138] sm:$0xff]
        %v618 = vld [vmem:[#allocation5 + $0x140] sm:$0xff]
        %v619 = vld [vmem:[#allocation5 + $0x148] sm:$0xff]
        %v620 = vld [vmem:[#allocation5 + $0x150] sm:$0xff]
        %v621 = vld [vmem:[#allocation5 + $0x158] sm:$0xff]
        %v622 = vld [vmem:[#allocation5 + $0x160] sm:$0xff]
        %v623 = vld [vmem:[#allocation5 + $0x168] sm:$0xff]
        %v624 = vld [vmem:[#allocation5 + $0x170] sm:$0xff]
        %v625 = vld [vmem:[#allocation5 + $0x178] sm:$0xff]
        %v626 = vld [vmem:[#allocation5 + $0x180] sm:$0xff]
        %v627 = vld [vmem:[#allocation5 + $0x188] sm:$0xff]
        %v628 = vld [vmem:[#allocation5 + $0x190] sm:$0xff]
        %v629 = vld [vmem:[#allocation5 + $0x198] sm:$0xff]
        %v630 = vld [vmem:[#allocation5 + $0x1a0] sm:$0xff]
        %v631 = vld [vmem:[#allocation5 + $0x1a8] sm:$0xff]
        %v632 = vld [vmem:[#allocation5 + $0x1b0] sm:$0xff]
        %v633 = vld [vmem:[#allocation5 + $0x1b8] sm:$0xff]
        %v634 = vld [vmem:[#allocation5 + $0x1c0] sm:$0xff]
        %v635 = vld [vmem:[#allocation5 + $0x1c8] sm:$0xff]
        %v636 = vld [vmem:[#allocation5 + $0x1d0] sm:$0xff]
        %v637 = vld [vmem:[#allocation5 + $0x1d8] sm:$0xff]
        %v638 = vld [vmem:[#allocation5 + $0x1e0] sm:$0xff]
        %v639 = vld [vmem:[#allocation5 + $0x1e8] sm:$0xff]
        %v640 = vld [vmem:[#allocation5 + $0x1f0] sm:$0xff]
        %v641 = vld [vmem:[#allocation5 + $0x1f8] sm:$0xff]
        %642 = vmatpush.msra.mxu0 %v608
        %643 = vmatpush.msra.mxu0 %v606
        %644 = vmatpush.msra.mxu0 %v604
        %645 = vmatpush.msra.mxu0 %v602
        %646 = vmatpush.msra.mxu0 %v600
        %647 = vmatpush.msra.mxu0 %v598
        %648 = vmatpush.msra.mxu0 %v596
        %649 = vmatpush.msra.mxu0 %v594
        %650 = vmatpush.msra.mxu0 %v592
        %651 = vmatpush.msra.mxu0 %v590
        %652 = vmatpush.msra.mxu0 %v588
        %653 = vmatpush.msra.mxu0 %v586
        %654 = vmatpush.msra.mxu0 %v584
        %655 = vmatpush.msra.mxu0 %v582
        %656 = vmatpush.msra.mxu0 %v580
        %657 = vmatpush.msra.mxu0 %v578
        %658 = vmatmul.f32.gmra.mxu0 %v576
        %v659 = vpop.f32.mrf.mxu0
        %v660 = vadd.f32 1e-09, %v659
        %661 = vdwg.mxu0
        %662 = vmatpush.msra.mxu0 %v640
        %663 = vmatpush.msra.mxu0 %v638
        %664 = vmatpush.msra.mxu0 %v636
        %665 = vmatpush.msra.mxu0 %v634
        %666 = vmatpush.msra.mxu0 %v632
        %667 = vmatpush.msra.mxu0 %v630
        %668 = vmatpush.msra.mxu0 %v628
        %669 = vmatpush.msra.mxu0 %v626
        %670 = vmatpush.msra.mxu0 %v624
        %671 = vmatpush.msra.mxu0 %v622
        %672 = vmatpush.msra.mxu0 %v620
        %673 = vmatpush.msra.mxu0 %v618
        %674 = vmatpush.msra.mxu0 %v616
        %675 = vmatpush.msra.mxu0 %v614
        %676 = vmatpush.msra.mxu0 %v612
        %677 = vmatpush.msra.mxu0 %v610
        %678 = vmatmul.f32.gmra.mxu0 %v577
        %v679 = vpop.f32.mrf.mxu0
        %v680 = vadd.f32 %v660, %v679
        %681 = vdwg.mxu0
        %682 = vmatpush.msra.mxu0 %v609
        %683 = vmatpush.msra.mxu0 %v607
        %684 = vmatpush.msra.mxu0 %v605
        %685 = vmatpush.msra.mxu0 %v603
        %686 = vmatpush.msra.mxu0 %v601
        %687 = vmatpush.msra.mxu0 %v599
        %688 = vmatpush.msra.mxu0 %v597
        %689 = vmatpush.msra.mxu0 %v595
        %690 = vmatpush.msra.mxu0 %v593
        %691 = vmatpush.msra.mxu0 %v591
        %692 = vmatpush.msra.mxu0 %v589
        %693 = vmatpush.msra.mxu0 %v587
        %694 = vmatpush.msra.mxu0 %v585
        %695 = vmatpush.msra.mxu0 %v583
        %696 = vmatpush.msra.mxu0 %v581
        %697 = vmatpush.msra.mxu0 %v579
        %698 = vmatmul.f32.gmra.mxu0 %v576
        %v699 = vpop.f32.mrf.mxu0
        %v700 = vadd.f32 1e-09, %v699
        %701 = vdwg.mxu0
        %702 = vmatpush.msra.mxu0 %v641
        %703 = vmatpush.msra.mxu0 %v639
        %704 = vmatpush.msra.mxu0 %v637
        %705 = vmatpush.msra.mxu0 %v635
        %706 = vmatpush.msra.mxu0 %v633
        %707 = vmatpush.msra.mxu0 %v631
        %708 = vmatpush.msra.mxu0 %v629
        %709 = vmatpush.msra.mxu0 %v627
        %710 = vmatpush.msra.mxu0 %v625
        %711 = vmatpush.msra.mxu0 %v623
        %712 = vmatpush.msra.mxu0 %v621
        %713 = vmatpush.msra.mxu0 %v619
        %714 = vmatpush.msra.mxu0 %v617
        %715 = vmatpush.msra.mxu0 %v615
        %716 = vmatpush.msra.mxu0 %v613
        %717 = vmatpush.msra.mxu0 %v611
        %718 = vmatmul.f32.gmra.mxu0 %v577
        %v719 = vpop.f32.mrf.mxu0
        %v720 = vadd.f32 %v700, %v719
        %721 = vdwg.mxu0
        %v722 = vrcp.pop %v680
        %v723 = vrcp.pop %v720
        %v724 = vmul.f32 %v576, %v722
        %v725 = vmul.f32 %v577, %v723
        %v726 = vld [vmem:[%s6] sm:$0xff]
        %v727 = vld [vmem:[%s6 + $0x8] sm:$0xff]
        %v728 = vld [vmem:[%s6 + $0x10] sm:$0xff]
        %v729 = vld [vmem:[%s6 + $0x18] sm:$0xff]
        %v730 = vld [vmem:[%s6 + $0x20] sm:$0xff]
        %v731 = vld [vmem:[%s6 + $0x28] sm:$0xff]
        %v732 = vld [vmem:[%s6 + $0x30] sm:$0xff]
        %v733 = vld [vmem:[%s6 + $0x38] sm:$0xff]
        %v734 = vld [vmem:[%s6 + $0x40] sm:$0xff]
        %v735 = vld [vmem:[%s6 + $0x48] sm:$0xff]
        %v736 = vld [vmem:[%s6 + $0x50] sm:$0xff]
        %v737 = vld [vmem:[%s6 + $0x58] sm:$0xff]
        %v738 = vld [vmem:[%s6 + $0x60] sm:$0xff]
        %v739 = vld [vmem:[%s6 + $0x68] sm:$0xff]
        %v740 = vld [vmem:[%s6 + $0x70] sm:$0xff]
        %v741 = vld [vmem:[%s6 + $0x78] sm:$0xff]
        %v742 = vld [vmem:[%s6 + $0x80] sm:$0xff]
        %v743 = vld [vmem:[%s6 + $0x88] sm:$0xff]
        %v744 = vld [vmem:[%s6 + $0x90] sm:$0xff]
        %v745 = vld [vmem:[%s6 + $0x98] sm:$0xff]
        %v746 = vld [vmem:[%s6 + $0xa0] sm:$0xff]
        %v747 = vld [vmem:[%s6 + $0xa8] sm:$0xff]
        %v748 = vld [vmem:[%s6 + $0xb0] sm:$0xff]
        %v749 = vld [vmem:[%s6 + $0xb8] sm:$0xff]
        %v750 = vld [vmem:[%s6 + $0xc0] sm:$0xff]
        %v751 = vld [vmem:[%s6 + $0xc8] sm:$0xff]
        %v752 = vld [vmem:[%s6 + $0xd0] sm:$0xff]
        %v753 = vld [vmem:[%s6 + $0xd8] sm:$0xff]
        %v754 = vld [vmem:[%s6 + $0xe0] sm:$0xff]
        %v755 = vld [vmem:[%s6 + $0xe8] sm:$0xff]
        %v756 = vld [vmem:[%s6 + $0xf0] sm:$0xff]
        %v757 = vld [vmem:[%s6 + $0xf8] sm:$0xff]
        %v758 = vld [vmem:[%s7] sm:$0x1]
        %v760 = vperm.slane %v758, 0
        %762 = vmatpush.msra.mxu0 %v741
        %763 = vmatpush.msra.mxu0 %v740
        %764 = vmatpush.msra.mxu0 %v739
        %765 = vmatpush.msra.mxu0 %v738
        %766 = vmatpush.msra.mxu0 %v737
        %767 = vmatpush.msra.mxu0 %v736
        %768 = vmatpush.msra.mxu0 %v735
        %769 = vmatpush.msra.mxu0 %v734
        %770 = vmatpush.msra.mxu0 %v733
        %771 = vmatpush.msra.mxu0 %v732
        %772 = vmatpush.msra.mxu0 %v731
        %773 = vmatpush.msra.mxu0 %v730
        %774 = vmatpush.msra.mxu0 %v729
        %775 = vmatpush.msra.mxu0 %v728
        %776 = vmatpush.msra.mxu0 %v727
        %777 = vmatpush.msra.mxu0 %v726
        %778 = vmatmul.f32.gmra.mxu0 %v724
        %v779 = vpop.f32.mrf.mxu0
        %v780 = vadd.f32 %v760, %v779
        %781 = vdwg.mxu0
        %782 = vmatpush.msra.mxu0 %v757
        %783 = vmatpush.msra.mxu0 %v756
        %784 = vmatpush.msra.mxu0 %v755
        %785 = vmatpush.msra.mxu0 %v754
        %786 = vmatpush.msra.mxu0 %v753
        %787 = vmatpush.msra.mxu0 %v752
        %788 = vmatpush.msra.mxu0 %v751
        %789 = vmatpush.msra.mxu0 %v750
        %790 = vmatpush.msra.mxu0 %v749
        %791 = vmatpush.msra.mxu0 %v748
        %792 = vmatpush.msra.mxu0 %v747
        %793 = vmatpush.msra.mxu0 %v746
        %794 = vmatpush.msra.mxu0 %v745
        %795 = vmatpush.msra.mxu0 %v744
        %796 = vmatpush.msra.mxu0 %v743
        %797 = vmatpush.msra.mxu0 %v742
        %798 = vmatmul.f32.gmra.mxu0 %v725
        %v799 = vpop.f32.mrf.mxu0
        %v800 = vadd.f32 %v780, %v799
        %801 = vdwg.mxu0
        %802 = vst.msk [vmem:[%s330] sm:$0xff] %vm350, %v800
        %s803 = sand.u32 %s205, 1
        %s804 = scalar_lea.sflag [#allocation4], %s803
        %s805 = sand.u32 %s205, 1
        %s806 = smul.addr %s805, 8
        %s807 = scalar_lea.vmem [#allocation7], %s806
        // Predicated region
        $region61: #{tpu_custom_call.1} parent=51 // pred_check
          %p808 = pneg %p215
        $region62: #{tpu_custom_call.1} parent=51 // pred_check_branch
          %810 = sbr.rel (%p808) target = $region64
        $region63: #{tpu_custom_call.1} parent=51 // pred_region
          %812 = vsyncadd %s804, 0
          %s813 = smul.addr %s24, 8
          %s814 = scalar_lea.hbm %s8, %s813
          %s816 = sshll.u32 %s807, 4
          %s817 = int_to_ptr.vmem [resolvable:$true] %s816
          %s818 = sshll.u32 %s814, 4
          %s819 = int_to_ptr.hbm [resolvable:$true] %s818
          %821 = dma.vmem_to_hbm [thread:$0]  %s817, 128, %s819, %s804
        $region64: #{tpu_custom_call.1} parent=51 // pred_fallthru
          _
      $region52: #{tpu_custom_call.1} parent=5 // pred_fallthru
        _
      %p822 = scmp.le.s32.totalorder 2, %s19
      // Predicated region
      $region65: #{tpu_custom_call.1} parent=5 // pred_check
        %p823 = pneg %p822
      $region66: #{tpu_custom_call.1} parent=5 // pred_check_branch
        %825 = sbr.rel (%p823) target = $region68
      $region67: #{tpu_custom_call.1} parent=5 // pred_region
        %s826 = ssub.s32 %s19, 2
        // Predicated region
        $region69: #{tpu_custom_call.1} parent=67 // pred_check
          %p827 = pneg %p221
        $region70: #{tpu_custom_call.1} parent=67 // pred_check_branch
          %829 = sbr.rel (%p827) target = $region72
        $region71: #{tpu_custom_call.1} parent=67 // pred_region
          %s830 = sand.u32 %s206, 1
          %s831 = scalar_lea.sflag [#allocation4], %s830
          %s832 = sand.u32 %s206, 1
          %s833 = smul.addr %s832, 8
          %s834 = scalar_lea.vmem [#allocation7], %s833
          %836 = dma.done %s831, 128
        $region72: #{tpu_custom_call.1} parent=67 // pred_fallthru
          _
      $region68: #{tpu_custom_call.1} parent=5 // pred_fallthru
        _
    $region6: #{tpu_custom_call.1} parent=1 // loop_footer
      %s23 = sadd.s32 1, %s19
    $region7: #{tpu_custom_call.1} parent=1 // loop_footer_branch
      %18 = sbr.rel target = $region3
    $region8: #{tpu_custom_call.1} parent=1 // loop_exit
      _
    %837 = vsyncpa [#allocation3], 1
    %s838 = scalar_lea.sflag [#allocation3], 1
    %839 = vsyncpa %s838, 1
    %840 = vsyncpa [#allocation6], 1
    %841 = vsyncpa [#allocation4], 1
    %s842 = scalar_lea.sflag [#allocation4], 1
    %843 = vsyncpa %s842, 1

</llo_original>
